<compile_context>
chip_gen: v6e
topology: v6e:2x2x1
jax: 0.10.0
libtpu: 0.0.40
codegen_flags: <defaults>
</compile_context>

<pallas_src>
import functools

import jax
import jax.numpy as jnp
from jax.experimental import pallas as pl
from jax.experimental.pallas import tpu as pltpu


def _ce2d_kernel(x_ref, t_ref, acc_ref, *, hw, tiles_per_chunk):
    """One grid step over (n, p, j): per-pixel NLL for a (C, tile_m) logits tile.

    x_ref:   (C, tile_m) logits (any float dtype; widened to f32 in-register)
    t_ref:   (1, tile_m) integer target class ids (any int dtype; upcast here)
    acc_ref: (1, tile_m) f32 per-lane partial sums (output block revisited
             across the in-chunk tile axis j)
    """
    p = pl.program_id(1)
    j = pl.program_id(2)
    tile_m = t_ref.shape[-1]

    @pl.when(j == 0)
    def _():
        acc_ref[...] = jnp.zeros_like(acc_ref)

    x = x_ref[...].astype(jnp.float32)                # (C, tile_m)
    t = t_ref[...].astype(jnp.int32)                  # (1, tile_m)

    # numerically-stable log-sum-exp over the class (sublane) axis
    m = jnp.max(x, axis=0, keepdims=True)             # (1, tile_m)
    lse = jnp.log(jnp.sum(jnp.exp(x - m), axis=0, keepdims=True)) + m

    # x[target] via a tiny (C, 1) class iota broadcast inside the compare
    # (avoids regenerating a full (C, tile_m) iota tensor every grid step).
    cls = jax.lax.broadcasted_iota(jnp.int32, (x.shape[0], 1), 0)
    x_t = jnp.sum(jnp.where(cls == t, x, 0.0), axis=0, keepdims=True)

    # global pixel index of every lane; masks the ragged last block and any
    # fully-out-of-range (index-clamped, duplicated) tiles of the last chunk.
    col = (p * tiles_per_chunk + j) * tile_m + jax.lax.broadcasted_iota(
        jnp.int32, t.shape, 1)
    acc_ref[...] += jnp.where(col < hw, lse - x_t, 0.0)


def _choose_tile(hw, c, x_itemsize, block_m):
    """Pick a lane-dense pixel tile (multiple of 128, or the full extent) sized
    from a ~28 MiB pipelined-VMEM budget so the double-buffered logits tile,
    the sublane-padded target/accumulator blocks and the in-kernel f32
    temporaries fit inside scoped VMEM on v5e/v6e (128 MiB) and v7x (64 MiB
    per TensorCore). Returns (tile_m, num_chunks, tiles_per_chunk)."""
    pad_c = ((c + 7) // 8) * 8
    # approximate pipelined-VMEM bytes needed per output lane
    per_lane = (
        2 * pad_c * x_itemsize    # logits tile, double buffered (streamed dtype)
        + 2 * 8 * 4               # target tile, sublane padded, double buffered
        + 2 * 8 * 4               # revisited f32 accumulator block (2 buffers)
        + 3 * pad_c * 4           # in-kernel f32 temporaries (widened x, exp, select)
    )
    if block_m is None:
        budget = 28 * 1024 * 1024
        target = (budget // per_lane) // 128 * 128
        target = max(128, min(target, 512 * 1024))
    else:
        target = max(128, (int(block_m) // 128) * 128)
    if hw <= target:
        return hw, 1, 1                                # full extent: always legal
    tile_m = target
    total_tiles = pl.cdiv(hw, tile_m)
    num_chunks = 2 if total_tiles >= 2 else 1          # feed both v7x TCs even at N=1
    tiles_per_chunk = pl.cdiv(total_tiles, num_chunks)
    return tile_m, num_chunks, tiles_per_chunk


def cross_entropy_loss_2d(inputs, targets, *, size_average=True, block_m=None):
    """Equivalent of CrossEntropyLoss2d(weight=None, size_average=True).forward.

    inputs:  (N, C, H, W) float logits (NCHW, like PyTorch). Pass bf16 to halve
             HBM traffic — the kernel widens to f32 in-register.
    targets: (N, H, W) integer class ids in [0, C). Narrow dtypes (uint8/int16)
             are streamed as-is to cut target HBM traffic; upcast is in-kernel.
    returns: scalar float32 loss
    """
    # TODO(synk): per-class `weight` constructor arg not implemented (weight=None path only).
    # TODO(synk): v7x sublane-occupancy fold (pixels into sublanes for tiny C) not implemented.
    N, C, H, W = inputs.shape
    HW = H * W

    # NCHW consumed directly: reshape only merges the two trailing contiguous dims.
    x = inputs.reshape(N, C, HW)

    t = targets
    if (not jnp.issubdtype(t.dtype, jnp.integer)) or t.dtype.itemsize > 4:
        t = t.astype(jnp.int32)                        # PyTorch .long() semantics
    t = t.reshape(N, 1, HW)

    tile_m, num_chunks, tiles_per_chunk = _choose_tile(HW, C, x.dtype.itemsize, block_m)
    last_block = pl.cdiv(HW, tile_m) - 1

    def in_index_map(n, p, j):
        # Clamp so the (possibly empty) trailing tiles of the last chunk never
        # address past the pixel axis; their lanes are masked out in-kernel.
        return (n, 0, jnp.minimum(p * tiles_per_chunk + j, last_block))

    cost = pl.CostEstimate(
        flops=int(6 * N * C * HW),
        transcendentals=int(N * (C + 1) * HW),
        bytes_accessed=int(x.size * x.dtype.itemsize
                           + t.size * t.dtype.itemsize
                           + N * num_chunks * tile_m * 4),
    )

    partial = pl.pallas_call(
        functools.partial(_ce2d_kernel, hw=HW, tiles_per_chunk=tiles_per_chunk),
        out_shape=jax.ShapeDtypeStruct((N, num_chunks, 1, tile_m), jnp.float32),
        grid_spec=pltpu.PrefetchScalarGridSpec(
            num_scalar_prefetch=0,
            grid=(N, num_chunks, tiles_per_chunk),
            in_specs=[
                pl.BlockSpec((pl.Squeezed(), C, tile_m), in_index_map),
                pl.BlockSpec((pl.Squeezed(), 1, tile_m), in_index_map),
            ],
            out_specs=pl.BlockSpec(
                (pl.Squeezed(), pl.Squeezed(), 1, tile_m),
                lambda n, p, j: (n, p, 0, 0)),
        ),
        compiler_params=pltpu.CompilerParams(
            # image axis and pixel-chunk axis can both be sharded across the
            # two v7x TensorCores; the in-chunk tile axis is a sequential
            # accumulation into the revisited output block.
            dimension_semantics=("parallel", "parallel", "arbitrary"),
            vmem_limit_bytes=48 * 1024 * 1024,
        ),
        cost_estimate=cost,
    )(x, t)

    total = jnp.sum(partial)                           # tiny reduce + mean in XLA
    if size_average:
        total = total / jnp.float32(N * HW)
    return total


def _reference_loss(inputs, targets):
    """Pure-JAX reference: mean(-log_softmax(inputs, axis=1)[target])."""
    logp = jax.nn.log_softmax(inputs.astype(jnp.float32), axis=1)  # (N,C,H,W)
    t = targets.astype(jnp.int32)
    picked = jnp.take_along_axis(logp, t[:, None, :, :], axis=1)[:, 0]
    return -jnp.mean(picked)


if __name__ == "__main__":
    key = jax.random.PRNGKey(0)
    k1, k2, k3, k4 = jax.random.split(key, 4)

    # Canonical small shapes: N=2, C=4, H=W=16 (single full-extent tile path).
    N, C, H, W = 2, 4, 16, 16
    inputs = jax.random.normal(k1, (N, C, H, W), dtype=jnp.float32)
    targets = jax.random.randint(k2, (N, H, W), 0, C, dtype=jnp.int32)

    loss = jax.block_until_ready(cross_entropy_loss_2d(inputs, targets))
    ref = _reference_loss(inputs, targets)
    assert jnp.allclose(loss, ref, atol=1e-5, rtol=1e-5), (loss, ref)

    # Ragged / multi-chunk path: HW=320 with forced 128-lane tiles exercises the
    # padded last block, the index-clamped duplicate tile, and the 2-chunk
    # parallel split, with bf16 logits and int16 targets streamed in.
    H2, W2 = 16, 20
    inputs2 = jax.random.normal(k3, (N, C, H2, W2), dtype=jnp.bfloat16)
    targets2 = jax.random.randint(k4, (N, H2, W2), 0, C, dtype=jnp.int32).astype(jnp.int16)
    loss2 = jax.block_until_ready(cross_entropy_loss_2d(inputs2, targets2, block_m=128))
    ref2 = _reference_loss(inputs2, targets2)
    assert jnp.allclose(loss2, ref2, atol=1e-4, rtol=1e-4), (loss2, ref2)

    print("KERNEL_OK")
</pallas_src>

<mosaic_0001>
module attributes {stable_mosaic.version = 11 : i64} {
  func.func @_ce2d_kernel(%arg0: i32, %arg1: i32, %arg2: i32, %arg3: memref<1x4x256xf32, #tpu.memory_space<vmem>>, %arg4: memref<1x1x256xi32, #tpu.memory_space<vmem>>, %arg5: memref<1x1x1x256xf32, #tpu.memory_space<vmem>>) attributes {dimension_semantics = [#tpu.dimension_semantics<parallel>, #tpu.dimension_semantics<parallel>, #tpu.dimension_semantics<arbitrary>], iteration_bounds = array<i64: 2, 1, 1>, scalar_prefetch = 0 : i64, scratch_operands = 0 : i64, tpu.core_type = #tpu.core_type<tc>, window_params = [{transform_indices = @transform_0, window_bounds = array<i64: 1, 4, 256>}, {transform_indices = @transform_1, window_bounds = array<i64: 1, 1, 256>}, {transform_indices = @transform_2, window_bounds = array<i64: 1, 1, 1, 256>}]} {
    %c0_i32 = arith.constant 0 : i32
    %0 = arith.cmpi eq, %arg2, %c0_i32 : i32
    %1 = arith.extui %0 : i1 to i32
    %c0_i32_0 = arith.constant 0 : i32
    %2 = arith.cmpi ne, %1, %c0_i32_0 : i32
    scf.if %2 {
      %cst_19 = arith.constant 0.000000e+00 : f32
      %41 = vector.broadcast %cst_19 : f32 to vector<1x256xf32>
      %c0_20 = arith.constant 0 : index
      %c0_21 = arith.constant 0 : index
      %c0_22 = arith.constant 0 : index
      %c0_23 = arith.constant 0 : index
      %42 = vector.load %arg5[%c0_20, %c0_21, %c0_22, %c0_23] : memref<1x1x1x256xf32, #tpu.memory_space<vmem>>, vector<1x1x1x256xf32>
      %43 = vector.shape_cast %42 : vector<1x1x1x256xf32> to vector<1x256xf32>
      %44 = vector.shape_cast %41 : vector<1x256xf32> to vector<1x1x1x256xf32>
      tpu.vector_store %arg5[%c0_20, %c0_21, %c0_22, %c0_23], %44 {strides = array<i32>} : memref<1x1x1x256xf32, #tpu.memory_space<vmem>>, vector<1x1x1x256xf32>,
    } else {
    }
    %c0 = arith.constant 0 : index
    %c0_1 = arith.constant 0 : index
    %c0_2 = arith.constant 0 : index
    %3 = vector.load %arg3[%c0, %c0_1, %c0_2] : memref<1x4x256xf32, #tpu.memory_space<vmem>>, vector<1x4x256xf32>
    %4 = vector.shape_cast %3 : vector<1x4x256xf32> to vector<4x256xf32>
    %c0_3 = arith.constant 0 : index
    %c0_4 = arith.constant 0 : index
    %c0_5 = arith.constant 0 : index
    %5 = vector.load %arg4[%c0_3, %c0_4, %c0_5] : memref<1x1x256xi32, #tpu.memory_space<vmem>>, vector<1x1x256xi32>
    %6 = vector.shape_cast %5 : vector<1x1x256xi32> to vector<1x256xi32>
    %cst = arith.constant dense<0xFF800000> : vector<256xf32>
    %7 = vector.multi_reduction <maximumf>, %4, %cst [0] : vector<4x256xf32> to vector<256xf32>
    %8 = vector.shape_cast %7 : vector<256xf32> to vector<1x256xf32>
    %9 = vector.broadcast %8 : vector<1x256xf32> to vector<4x256xf32>
    %10 = arith.subf %4, %9 : vector<4x256xf32>
    %11 = math.exp %10 : vector<4x256xf32>
    %cst_6 = arith.constant dense<0.000000e+00> : vector<256xf32>
    %12 = vector.multi_reduction <add>, %11, %cst_6 [0] : vector<4x256xf32> to vector<256xf32>
    %13 = vector.shape_cast %12 : vector<256xf32> to vector<1x256xf32>
    %14 = math.log %13 : vector<1x256xf32>
    %15 = arith.addf %14, %8 : vector<1x256xf32>
    %16 = tpu.iota {dimensions = array<i32: 0>} : vector<4x1xi32>
    %17 = vector.broadcast %16 : vector<4x1xi32> to vector<4x256xi32>
    %18 = vector.broadcast %6 : vector<1x256xi32> to vector<4x256xi32>
    %19 = arith.cmpi eq, %17, %18 : vector<4x256xi32>
    %cst_7 = arith.constant 0.000000e+00 : f32
    %20 = vector.broadcast %cst_7 : f32 to vector<4x256xf32>
    %21 = arith.select %19, %4, %20 : vector<4x256xi1>, vector<4x256xf32>
    %cst_8 = arith.constant dense<0.000000e+00> : vector<256xf32>
    %22 = vector.multi_reduction <add>, %21, %cst_8 [0] : vector<4x256xf32> to vector<256xf32>
    %23 = vector.shape_cast %22 : vector<256xf32> to vector<1x256xf32>
    %c1_i32 = arith.constant 1 : i32
    %24 = arith.muli %arg1, %c1_i32 : i32
    %25 = arith.addi %24, %arg2 : i32
    %c256_i32 = arith.constant 256 : i32
    %26 = arith.muli %25, %c256_i32 : i32
    %27 = tpu.iota {dimensions = array<i32: 1>} : vector<1x256xi32>
    %28 = vector.broadcast %26 : i32 to vector<1x256xi32>
    %29 = arith.addi %28, %27 : vector<1x256xi32>
    %c0_9 = arith.constant 0 : index
    %c0_10 = arith.constant 0 : index
    %c0_11 = arith.constant 0 : index
    %c0_12 = arith.constant 0 : index
    %30 = vector.load %arg5[%c0_9, %c0_10, %c0_11, %c0_12] : memref<1x1x1x256xf32, #tpu.memory_space<vmem>>, vector<1x1x1x256xf32>
    %31 = vector.shape_cast %30 : vector<1x1x1x256xf32> to vector<1x256xf32>
    %c256_i32_13 = arith.constant 256 : i32
    %32 = vector.broadcast %c256_i32_13 : i32 to vector<1x256xi32>
    %33 = arith.cmpi slt, %29, %32 : vector<1x256xi32>
    %34 = arith.subf %15, %23 : vector<1x256xf32>
    %cst_14 = arith.constant 0.000000e+00 : f32
    %35 = vector.broadcast %cst_14 : f32 to vector<1x256xf32>
    %36 = arith.select %33, %34, %35 : vector<1x256xi1>, vector<1x256xf32>
    %37 = arith.addf %31, %36 : vector<1x256xf32>
    %c0_15 = arith.constant 0 : index
    %c0_16 = arith.constant 0 : index
    %c0_17 = arith.constant 0 : index
    %c0_18 = arith.constant 0 : index
    %38 = vector.load %arg5[%c0_15, %c0_16, %c0_17, %c0_18] : memref<1x1x1x256xf32, #tpu.memory_space<vmem>>, vector<1x1x1x256xf32>
    %39 = vector.shape_cast %38 : vector<1x1x1x256xf32> to vector<1x256xf32>
    %40 = vector.shape_cast %37 : vector<1x256xf32> to vector<1x1x1x256xf32>
    tpu.vector_store %arg5[%c0_15, %c0_16, %c0_17, %c0_18], %40 {strides = array<i32>} : memref<1x1x1x256xf32, #tpu.memory_space<vmem>>, vector<1x1x1x256xf32>,
    return
  }
  func.func @transform_0(%arg0: i32, %arg1: i32, %arg2: i32) -> (i32, i32, i32) {
    %c1_i32 = arith.constant 1 : i32
    %0 = arith.muli %arg1, %c1_i32 : i32
    %1 = arith.addi %0, %arg2 : i32
    %c0_i32 = arith.constant 0 : i32
    %2 = arith.minsi %1, %c0_i32 : i32
    %c0_i32_0 = arith.constant 0 : i32
    %c0_i32_1 = arith.constant 0 : i32
    return %arg0, %c0_i32_0, %2 : i32, i32, i32
  }
  func.func @transform_1(%arg0: i32, %arg1: i32, %arg2: i32) -> (i32, i32, i32) {
    %c1_i32 = arith.constant 1 : i32
    %0 = arith.muli %arg1, %c1_i32 : i32
    %1 = arith.addi %0, %arg2 : i32
    %c0_i32 = arith.constant 0 : i32
    %2 = arith.minsi %1, %c0_i32 : i32
    %c0_i32_0 = arith.constant 0 : i32
    %c0_i32_1 = arith.constant 0 : i32
    return %arg0, %c0_i32_0, %2 : i32, i32, i32
  }
  func.func @transform_2(%arg0: i32, %arg1: i32, %arg2: i32) -> (i32, i32, i32, i32) {
    %c0_i32 = arith.constant 0 : i32
    %c0_i32_0 = arith.constant 0 : i32
    %c0_i32_1 = arith.constant 0 : i32
    return %arg0, %arg1, %c0_i32, %c0_i32_0 : i32, i32, i32, i32
  }
}

</mosaic_0001>

<llo_original>
// kernel: tpu_custom_call.1
$region0: #{tpu_custom_call.1}
  #allocation0 [shape = 'u32[]', space=smem, size = 0x4, offset = 0x4, fixed_abs, tag = 'smem constant byte address 0x4 - core index']
  #allocation1 [shape = 'u32[144,128]{1,0:T(1,128)}', space=vmem, size = 0x12000, scoped, tag = 'internal scratch']
  %s0 = inlined_call_operand.hbm [shape: f32[2,4,256], index: 0, kind: input, shape index: {}]
  %s1 = inlined_call_operand.hbm [shape: s32[2,1,256], index: 1, kind: input, shape index: {}]
  %s2 = inlined_call_operand.hbm [shape: f32[2,1,1,256], index: 2, kind: output, shape index: {}]
  %s3 = sld [smem:[#allocation0]]
  $region53: #{tpu_custom_call.1} parent=0
    _
  %s5 = ssub.s32 1, %s3
  %s6 = scalar_select 0, %s5, %s3
  $region1: #{tpu_custom_call.1} parent=0
    #allocation2 [shape = 'u8[8192]{0}', space=vmem, size = 0x2000, scoped, tag = 'input window, operand 0']
    #allocation3 [shape = 's32[2]{0}', space=sflag, size = 0x8, scoped, tag = 'scoped memory for tpu_custom_call.1']
    #allocation4 [shape = 's32[2]{0}', space=sflag, size = 0x8, scoped, tag = 'scoped memory for tpu_custom_call.1']
    #allocation5 [shape = 'u8[2048]{0}', space=vmem, size = 0x800, scoped, tag = 'input window, operand 1']
    #allocation6 [shape = 's32[2]{0}', space=sflag, size = 0x8, scoped, tag = 'scoped memory for tpu_custom_call.1']
    #allocation7 [shape = 'u8[2048]{0}', space=vmem, size = 0x800, scoped, tag = 'output window, operand 0']
    %7 = vsyncpa [#allocation3], 0
    %s8 = scalar_lea.sflag [#allocation3], 1
    %9 = vsyncpa %s8, 0
    %10 = vsyncpa [#allocation6], 0
    %s11 = scalar_lea.sflag [#allocation6], 1
    %12 = vsyncpa %s11, 0
    %13 = vsyncpa [#allocation4], 0
    %s14 = scalar_lea.sflag [#allocation4], 1
    %15 = vsyncpa %s14, 0
    loop: start=0, step=1, limit=4
    $region2: #{tpu_custom_call.1} parent=1 // loop_pre_header
      _
    $region3: #{tpu_custom_call.1} parent=1 // loop_header
      %s17 = sphi 0, %s21
      %p18 = scmp.ge.s32.totalorder %s17, 4
      %s24 = sphi 0, %s43
      %s25 = sphi 0, %s39
      %s26 = sphi 0, %s35
      %s27 = sphi 0, %s24
      %s28 = sphi 0, %s25
      %s29 = sphi 0, %s26
      %s30 = sphi 0, %s27
      %s31 = sphi 0, %s28
      %s32 = sphi 0, %s29
      %s54 = sphi 0, %s56
      %s57 = sphi 0, %s54
      %s58 = sphi 0, %s57
      %s74 = sphi 0, %s58
      %s88 = sphi 0, %s90
      %s91 = sphi 0, %s88
      %s92 = sphi 0, %s91
      %s108 = sphi 0, %s92
      %s116 = sphi 0, %s118
      %s119 = sphi 0, %s116
      %s120 = sphi 0, %s119
      %s136 = sphi 0, %s120
    $region4: #{tpu_custom_call.1} parent=1 // loop_header_branch
      %20 = sbr.rel (%p18) target = $region8
    $region5: #{tpu_custom_call.1} parent=1 // loop_body
      %s22 = ssub.s32 %s17, 1
      %s23 = ssub.s32 %s17, 2
      %s33 = sadd.s32 1, %s26
      %p34 = scmp.ge.s32.totalorder %s33, 1
      %s35 = scalar_select %p34, 0, %s33
      %s36 = sadd.s32 1, %s25
      %s37 = scalar_select %p34, %s36, %s25
      %p38 = scmp.ge.s32.totalorder %s37, 1
      %s39 = scalar_select %p38, 0, %s37
      %s40 = sadd.s32 1, %s24
      %s41 = scalar_select %p38, %s40, %s24
      %p42 = scmp.ge.s32.totalorder %s41, 2
      %s43 = scalar_select %p42, 0, %s41
      %s44 = sadd.s32 %s25, %s26
      %p45 = scmp.lt.s32.totalorder %s44, 0
      %s46 = scalar_select %p45, %s44, 0
      %s47 = sadd.s32 %s39, %s35
      %p48 = scmp.lt.s32.totalorder %s47, 0
      %s49 = scalar_select %p48, %s47, 0
      %s50 = ssub.s32 %s24, %s43
      %s51 = ssub.s32 %s46, %s49
      %s52 = sor.u32 %s50, %s51
      %p53 = scmp.eq.s32.totalorder %s52, 0
      %s55 = sadd.s32 %s54, 1
      %s56 = scalar_select %p53, %s54, %s55
      %p59 = pneg %p53
      %p60 = scmp.eq.s32.totalorder %s17, 1
      %p61 = por %p59, %p60
      %p62 = scmp.ne.s32.totalorder %s54, %s57
      %p63 = scmp.eq.s32.totalorder %s17, 0
      %p64 = por %p62, %p63
      %p65 = scmp.ne.s32.totalorder %s54, %s57
      %p66 = scmp.eq.s32.totalorder %s22, 1
      %p67 = por %p65, %p66
      %p68 = scmp.ne.s32.totalorder %s57, %s58
      %p69 = scmp.eq.s32.totalorder %s22, 0
      %p70 = por %p68, %p69
      %p71 = scmp.ne.s32.totalorder %s57, %s58
      %p72 = scmp.eq.s32.totalorder %s23, 1
      %p73 = por %p71, %p72
      %p75 = scmp.ne.s32.totalorder %s58, %s74
      %p76 = scmp.eq.s32.totalorder %s23, 0
      %p77 = por %p75, %p76
      %s78 = sadd.s32 %s25, %s26
      %p79 = scmp.lt.s32.totalorder %s78, 0
      %s80 = scalar_select %p79, %s78, 0
      %s81 = sadd.s32 %s39, %s35
      %p82 = scmp.lt.s32.totalorder %s81, 0
      %s83 = scalar_select %p82, %s81, 0
      %s84 = ssub.s32 %s24, %s43
      %s85 = ssub.s32 %s80, %s83
      %s86 = sor.u32 %s84, %s85
      %p87 = scmp.eq.s32.totalorder %s86, 0
      %s89 = sadd.s32 %s88, 1
      %s90 = scalar_select %p87, %s88, %s89
      %p93 = pneg %p87
      %p94 = scmp.eq.s32.totalorder %s17, 1
      %p95 = por %p93, %p94
      %p96 = scmp.ne.s32.totalorder %s88, %s91
      %p97 = scmp.eq.s32.totalorder %s17, 0
      %p98 = por %p96, %p97
      %p99 = scmp.ne.s32.totalorder %s88, %s91
      %p100 = scmp.eq.s32.totalorder %s22, 1
      %p101 = por %p99, %p100
      %p102 = scmp.ne.s32.totalorder %s91, %s92
      %p103 = scmp.eq.s32.totalorder %s22, 0
      %p104 = por %p102, %p103
      %p105 = scmp.ne.s32.totalorder %s91, %s92
      %p106 = scmp.eq.s32.totalorder %s23, 1
      %p107 = por %p105, %p106
      %p109 = scmp.ne.s32.totalorder %s92, %s108
      %p110 = scmp.eq.s32.totalorder %s23, 0
      %p111 = por %p109, %p110
      %s112 = ssub.s32 %s24, %s43
      %s113 = ssub.s32 %s25, %s39
      %s114 = sor.u32 %s112, %s113
      %p115 = scmp.eq.s32.totalorder %s114, 0
      %s117 = sadd.s32 %s116, 1
      %s118 = scalar_select %p115, %s116, %s117
      %p121 = pneg %p115
      %p122 = scmp.eq.s32.totalorder %s17, 1
      %p123 = por %p121, %p122
      %p124 = scmp.ne.s32.totalorder %s116, %s119
      %p125 = scmp.eq.s32.totalorder %s17, 0
      %p126 = por %p124, %p125
      %p127 = scmp.ne.s32.totalorder %s116, %s119
      %p128 = scmp.eq.s32.totalorder %s22, 1
      %p129 = por %p127, %p128
      %p130 = scmp.ne.s32.totalorder %s119, %s120
      %p131 = scmp.eq.s32.totalorder %s22, 0
      %p132 = por %p130, %p131
      %p133 = scmp.ne.s32.totalorder %s119, %s120
      %p134 = scmp.eq.s32.totalorder %s23, 1
      %p135 = por %p133, %p134
      %p137 = scmp.ne.s32.totalorder %s120, %s136
      %p138 = scmp.eq.s32.totalorder %s23, 0
      %p139 = por %p137, %p138
      %p140 = scmp.le.s32.totalorder 1, %s17
      %p141 = scmp.lt.s32.totalorder %s17, 3
      %p142 = pnand %p140, %p141
      %p143 = pneg %p142
      // Predicated region
      $region9: #{tpu_custom_call.1} parent=5 // pred_check
        _
      $region10: #{tpu_custom_call.1} parent=5 // pred_check_branch
        %145 = sbr.rel (%p142) target = $region12
      $region11: #{tpu_custom_call.1} parent=5 // pred_region
        %s146 = ssub.s32 %s17, 1
      $region12: #{tpu_custom_call.1} parent=5 // pred_fallthru
        _
      %p147 = scmp.lt.s32.totalorder %s17, 2
      // Predicated region
      $region13: #{tpu_custom_call.1} parent=5 // pred_check
        %p148 = pneg %p147
      $region14: #{tpu_custom_call.1} parent=5 // pred_check_branch
        %150 = sbr.rel (%p148) target = $region16
      $region15: #{tpu_custom_call.1} parent=5 // pred_region
        // Predicated region
        $region17: #{tpu_custom_call.1} parent=15 // pred_check
          %p151 = pneg %p64
        $region18: #{tpu_custom_call.1} parent=15 // pred_check_branch
          %153 = sbr.rel (%p151) target = $region20
        $region19: #{tpu_custom_call.1} parent=15 // pred_region
          %s154 = sand.u32 %s54, 1
          %s155 = scalar_lea.sflag [#allocation3], %s154
          %s156 = sand.u32 %s54, 1
          %s157 = smul.addr %s156, 8
          %s158 = scalar_lea.vmem [#allocation2], %s157
          %s159 = sadd.s32 %s25, %s26
          %p160 = scmp.lt.s32.totalorder %s159, 0
          %s161 = scalar_select %p160, %s159, 0
          %s162 = smul.u32 2, %s161
          %s164 = ssub.s32 128, 128
          %165 = vsyncadd %s155, %s164
          %s166 = smul.addr %s24, 2
          %s167 = sadd.s32 %s162, %s166
          %s168 = smul.addr %s167, 64
          %s169 = scalar_lea.hbm %s0, %s168
          %s171 = sshll.u32 %s158, 4
          %s172 = int_to_ptr.vmem [resolvable:$true] %s171
          %174 = dma.hbm_to_vmem [thread:$0]  %s169, 128, %s172, %s155
        $region20: #{tpu_custom_call.1} parent=15 // pred_fallthru
          _
        // Predicated region
        $region21: #{tpu_custom_call.1} parent=15 // pred_check
          %p175 = pneg %p98
        $region22: #{tpu_custom_call.1} parent=15 // pred_check_branch
          %177 = sbr.rel (%p175) target = $region24
        $region23: #{tpu_custom_call.1} parent=15 // pred_region
          %s178 = sand.u32 %s88, 1
          %s179 = scalar_lea.sflag [#allocation6], %s178
          %s180 = sand.u32 %s88, 1
          %s181 = smul.addr %s180, 2
          %s182 = scalar_lea.vmem [#allocation5], %s181
          %s183 = sadd.s32 %s25, %s26
          %p184 = scmp.lt.s32.totalorder %s183, 0
          %s185 = scalar_select %p184, %s183, 0
          %s186 = smul.u32 2, %s185
          %s188 = ssub.s32 32, 32
          %189 = vsyncadd %s179, %s188
          %s190 = smul.addr %s24, 2
          %s191 = sadd.s32 %s186, %s190
          %s192 = smul.addr %s191, 16
          %s193 = scalar_lea.hbm %s1, %s192
          %s195 = sshll.u32 %s182, 4
          %s196 = int_to_ptr.vmem [resolvable:$true] %s195
          %198 = dma.hbm_to_vmem [thread:$0]  %s193, 32, %s196, %s179
        $region24: #{tpu_custom_call.1} parent=15 // pred_fallthru
          _
      $region16: #{tpu_custom_call.1} parent=5 // pred_fallthru
        _
      %p199 = scmp.le.s32.totalorder 1, %s17
      %p200 = scmp.lt.s32.totalorder %s17, 3
      %p201 = pnand %p199, %p200
      %p202 = pneg %p201
      // Predicated region
      $region25: #{tpu_custom_call.1} parent=5 // pred_check
        _
      $region26: #{tpu_custom_call.1} parent=5 // pred_check_branch
        %204 = sbr.rel (%p201) target = $region28
      $region27: #{tpu_custom_call.1} parent=5 // pred_region
        %s205 = ssub.s32 %s17, 1
        %s206 = sand.u32 %s57, 1
        %s207 = scalar_lea.sflag [#allocation3], %s206
        %s208 = sand.u32 %s57, 1
        %s209 = smul.addr %s208, 8
        %s210 = scalar_lea.vmem [#allocation2], %s209
        // Predicated region
        $region29: #{tpu_custom_call.1} parent=27 // pred_check
          %p211 = pneg %p70
        $region30: #{tpu_custom_call.1} parent=27 // pred_check_branch
          %213 = sbr.rel (%p211) target = $region32
        $region31: #{tpu_custom_call.1} parent=27 // pred_region
          %214 = dma.done %s207, 128
        $region32: #{tpu_custom_call.1} parent=27 // pred_fallthru
          _
        %s215 = sand.u32 %s91, 1
        %s216 = scalar_lea.sflag [#allocation6], %s215
        %s217 = sand.u32 %s91, 1
        %s218 = smul.addr %s217, 2
        %s219 = scalar_lea.vmem [#allocation5], %s218
        // Predicated region
        $region33: #{tpu_custom_call.1} parent=27 // pred_check
          %p220 = pneg %p104
        $region34: #{tpu_custom_call.1} parent=27 // pred_check_branch
          %222 = sbr.rel (%p220) target = $region36
        $region35: #{tpu_custom_call.1} parent=27 // pred_region
          %223 = dma.done %s216, 32
        $region36: #{tpu_custom_call.1} parent=27 // pred_fallthru
          _
        %s224 = sand.u32 %s57, 1
        %s225 = scalar_lea.sflag [#allocation3], %s224
        %s226 = sand.u32 %s57, 1
        %s227 = smul.addr %s226, 8
        %s228 = scalar_lea.vmem [#allocation2], %s227
        %p229 = pneg %p70
        %p230 = pneg %p67
        %s231 = sand.u32 %s91, 1
        %s232 = scalar_lea.sflag [#allocation6], %s231
        %s233 = sand.u32 %s91, 1
        %s234 = smul.addr %s233, 2
        %s235 = scalar_lea.vmem [#allocation5], %s234
        %p236 = pneg %p104
        %p237 = pneg %p101
        %p238 = pneg %p132
        %p239 = pneg %p129
        %s240 = sand.u32 %s119, 1
        %s241 = scalar_lea.sflag [#allocation4], %s240
        %s242 = sand.u32 %s119, 1
        %s243 = smul.addr %s242, 2
        %s244 = scalar_lea.vmem [#allocation7], %s243
        %s245 = sadd.s32 %s28, %s29
        %p246 = scmp.lt.s32.totalorder %s245, 0
        %s247 = scalar_select %p246, %s245, 0
        %s248 = smul.u32 2, %s247
        %s249 = sadd.s32 %s28, %s29
        %p250 = scmp.lt.s32.totalorder %s249, 0
        %s251 = scalar_select %p250, %s249, 0
        %s252 = smul.u32 2, %s251
        %p253 = scmp.eq.s32.totalorder %s29, 0
        // Predicated region
        $region37: #{tpu_custom_call.1} parent=27 // pred_check
          %p254 = pneg %p253
        $region38: #{tpu_custom_call.1} parent=27 // pred_check_branch
          %256 = sbr.rel (%p254) target = $region40
        $region39: #{tpu_custom_call.1} parent=27 // pred_region
          %v257 = vlaneseq
          %vm258 = vcmp.ge.s32.totalorder %v257, 0
          %vm259 = vcmp.lt.s32.totalorder %v257, 256
          %vm260 = vmand %vm258, %vm259
          %261 = vst.msk [vmem:[%s244] sm:$0x3] %vm260, 0.0
        $region40: #{tpu_custom_call.1} parent=27 // pred_fallthru
          _
        %v262 = vld [vmem:[%s210] sm:$0xff]
        %v263 = vld [vmem:[%s219] sm:$0x3]
        %v265 = vcombine.high %v262, %v262
        %vm267 = vcmask 1043456
        %v268 = vsel %vm267, %v262, -inf
        %v269 = vrot.slane %v268, 4
        %v270 = vmax.f32 %v268, %v269
        %v271 = vrot.slane %v270, 2
        %v272 = vmax.f32 %v270, %v271
        %v273 = vrot.slane %v272, 1
        %v274 = vmax.f32 %v272, %v273
        %v275 = vsel %vm267, %v265, -inf
        %v276 = vrot.slane %v275, 4
        %v277 = vmax.f32 %v275, %v276
        %v278 = vrot.slane %v277, 2
        %v279 = vmax.f32 %v277, %v278
        %v280 = vrot.slane %v279, 1
        %v281 = vmax.f32 %v279, %v280
        %v284 = vcombine.low %v274, %v281
        %v286 = vsub.f32 %v262, %v284
        %v287 = vmul.f32 %v286, 1.442695
        %v288 = vpow.pop %v287
        %v290 = vcombine.high %v288, %v288
        %v292 = vsel %vm267, %v288, 0.0
        %v293 = vrot.slane %v292, 4
        %v294 = vadd.f32 %v292, %v293
        %v295 = vrot.slane %v294, 2
        %v296 = vadd.f32 %v294, %v295
        %v297 = vrot.slane %v296, 1
        %v298 = vadd.f32 %v296, %v297
        %v299 = vsel %vm267, %v290, 0.0
        %v300 = vrot.slane %v299, 4
        %v301 = vadd.f32 %v299, %v300
        %v302 = vrot.slane %v301, 2
        %v303 = vadd.f32 %v301, %v302
        %v304 = vrot.slane %v303, 1
        %v305 = vadd.f32 %v303, %v304
        %v306 = vlog2.pop %v298
        %v307 = vmul.f32 %v306, 0.6931472
        %v308 = vlog2.pop %v305
        %v309 = vmul.f32 %v308, 0.6931472
        %v310 = vadd.f32 %v307, %v274
        %v311 = vadd.f32 %v309, %v281
        %v312 = vlaneseq
        %v313 = vshrl.u32 %v312, 7
        %v314 = vlaneseq
        %v315 = vshrl.u32 %v314, 7
        %v316 = vsub.s32 0, %v315
        %v317 = vrot.slane %v263, %v316
        %v318 = vlaneseq
        %v319 = vshrl.u32 %v318, 7
        %v320 = vsub.s32 1, %v319
        %v321 = vrot.slane %v263, %v320
        %vm322 = vcmp.eq.s32.totalorder %v313, %v317
        %vm323 = vcmp.eq.s32.totalorder %v313, %v321
        %v324 = vsel %vm322, %v262, 0.0
        %v325 = vsel %vm323, %v265, 0.0
        %v326 = vsel %vm267, %v324, 0.0
        %v327 = vrot.slane %v326, 4
        %v328 = vadd.f32 %v326, %v327
        %v329 = vrot.slane %v328, 2
        %v330 = vadd.f32 %v328, %v329
        %v331 = vrot.slane %v330, 1
        %v332 = vadd.f32 %v330, %v331
        %v333 = vsel %vm267, %v325, 0.0
        %v334 = vrot.slane %v333, 4
        %v335 = vadd.f32 %v333, %v334
        %v336 = vrot.slane %v335, 2
        %v337 = vadd.f32 %v335, %v336
        %v338 = vrot.slane %v337, 1
        %v339 = vadd.f32 %v337, %v338
        %s340 = sadd.s32 %s28, %s29
        %s341 = smul.u32 %s340, 256
        %v342 = vlaneseq
        %v343 = vand.u32 %v342, 127
        %v344 = vadd.s32 %v343, 128
        %v345 = vstv %s341
        %v346 = vadd.s32 %v345, %v343
        %v347 = vadd.s32 %v345, %v344
        %v348 = vld [vmem:[%s244] sm:$0x3]
        %vm349 = vcmp.lt.s32.totalorder %v346, 256
        %vm350 = vcmp.lt.s32.totalorder %v347, 256
        %v351 = vsub.f32 %v310, %v332
        %v352 = vsub.f32 %v311, %v339
        %v353 = vsel %vm349, %v351, 0.0
        %v354 = vsel %vm350, %v352, 0.0
        %v357 = vcombine.low %v353, %v354
        %v359 = vunpack.c.l.s4 1966171168
        %v360 = vunpack.c.0.s8 %v359
        %v361 = vlaneseq
        %v362 = vshrl.u32 %v361, 7
        %v363 = vsub.s32 %v360, %v362
        %v364 = vrot.slane %v357, %v363
        %v366 = vunpack.c.l.s4 1966171168
        %v367 = vunpack.c.0.s8 %v366
        %v368 = vlaneseq
        %v369 = vshrl.u32 %v368, 7
        %v370 = vsub.s32 %v367, %v369
        %v371 = vrot.slane %v364, %v370
        %v373 = vadd.f32 %v348, %v371
        %v374 = vlaneseq
        %vm375 = vcmp.ge.s32.totalorder %v374, 0
        %vm376 = vcmp.lt.s32.totalorder %v374, 256
        %vm377 = vmand %vm375, %vm376
        %378 = vst.msk [vmem:[%s244] sm:$0x3] %vm377, %v373
        %s379 = sand.u32 %s119, 1
        %s380 = scalar_lea.sflag [#allocation4], %s379
        %s381 = sand.u32 %s119, 1
        %s382 = smul.addr %s381, 2
        %s383 = scalar_lea.vmem [#allocation7], %s382
        // Predicated region
        $region41: #{tpu_custom_call.1} parent=27 // pred_check
          %p384 = pneg %p129
        $region42: #{tpu_custom_call.1} parent=27 // pred_check_branch
          %386 = sbr.rel (%p384) target = $region44
        $region43: #{tpu_custom_call.1} parent=27 // pred_region
          %s388 = ssub.s32 32, 32
          %389 = vsyncadd %s380, %s388
          %s390 = smul.addr %s28, 2
          %s391 = smul.addr %s27, 2
          %s392 = sadd.s32 %s390, %s391
          %s393 = smul.addr %s392, 16
          %s394 = scalar_lea.hbm %s2, %s393
          %s396 = sshll.u32 %s383, 4
          %s397 = int_to_ptr.vmem [resolvable:$true] %s396
          %399 = dma.vmem_to_hbm [thread:$0]  %s397, 32, %s394, %s380
        $region44: #{tpu_custom_call.1} parent=27 // pred_fallthru
          _
      $region28: #{tpu_custom_call.1} parent=5 // pred_fallthru
        _
      %p400 = scmp.le.s32.totalorder 2, %s17
      // Predicated region
      $region45: #{tpu_custom_call.1} parent=5 // pred_check
        %p401 = pneg %p400
      $region46: #{tpu_custom_call.1} parent=5 // pred_check_branch
        %403 = sbr.rel (%p401) target = $region48
      $region47: #{tpu_custom_call.1} parent=5 // pred_region
        %s404 = ssub.s32 %s17, 2
        // Predicated region
        $region49: #{tpu_custom_call.1} parent=47 // pred_check
          %p405 = pneg %p135
        $region50: #{tpu_custom_call.1} parent=47 // pred_check_branch
          %407 = sbr.rel (%p405) target = $region52
        $region51: #{tpu_custom_call.1} parent=47 // pred_region
          %s408 = sand.u32 %s120, 1
          %s409 = scalar_lea.sflag [#allocation4], %s408
          %s410 = sand.u32 %s120, 1
          %s411 = smul.addr %s410, 2
          %s412 = scalar_lea.vmem [#allocation7], %s411
          %413 = dma.done %s409, 32
        $region52: #{tpu_custom_call.1} parent=47 // pred_fallthru
          _
      $region48: #{tpu_custom_call.1} parent=5 // pred_fallthru
        _
    $region6: #{tpu_custom_call.1} parent=1 // loop_footer
      %s21 = sadd.s32 1, %s17
    $region7: #{tpu_custom_call.1} parent=1 // loop_footer_branch
      %16 = sbr.rel target = $region3
    $region8: #{tpu_custom_call.1} parent=1 // loop_exit
      _
    %414 = vsyncpa [#allocation3], 1
    %s415 = scalar_lea.sflag [#allocation3], 1
    %416 = vsyncpa %s415, 1
    %417 = vsyncpa [#allocation6], 1
    %s418 = scalar_lea.sflag [#allocation6], 1
    %419 = vsyncpa %s418, 1
    %420 = vsyncpa [#allocation4], 1
    %s421 = scalar_lea.sflag [#allocation4], 1
    %422 = vsyncpa %s421, 1

</llo_original>
